<compile_context>
chip_gen: v5e
topology: v5e:2x2
jax: 0.10.0
libtpu: 0.0.40
codegen_flags: <defaults>
</compile_context>

<pallas_src>
import jax
import jax.numpy as jnp
from jax.experimental import pallas as pl
from jax.experimental.pallas import tpu as pltpu


def _coord_attn_kernel(x_ref, pool_ref, mh_ref, mw_ref,
                       w1_ref, w2_ref, w3_ref, bias_ref, o_ref):
    H = mh_ref.shape[0]
    TCb = w1_ref.shape[0]        # Bt * temp_c
    Cb = w2_ref.shape[0]         # Bt * C

    x2d = x_ref[...]                                                   # (Cb, HWp)

    # --- coordinate pooling over W and H: one matmul against the fused constant ---
    # pool_ref = [MhT * (1/W) | MwT * (1/H)]  -> (HWp, H+W)
    pooled = jnp.dot(x2d, pool_ref[...],
                     preferred_element_type=jnp.float32)               # (Cb, H+W)

    bias = bias_ref[...]
    b1 = bias[:TCb, 0:1]         # (Bt*temp_c, 1)
    b2 = bias[:Cb, 1:2]          # (Bt*C, 1)
    b3 = bias[:Cb, 2:3]          # (Bt*C, 1)

    # --- conv1 (1x1, BN folded) + h_swish over the concatenated (H+W) tensor.
    #     Batch handled by the block-diagonal weight built in the wrapper. ---
    y = jnp.dot(w1_ref[...], pooled, preferred_element_type=jnp.float32) + b1   # (TCb, H+W)
    y = y * jnp.clip(y + 3.0, 0.0, 6.0) * (1.0 / 6.0)                           # h_swish

    # --- conv2 / conv3 (1x1) + sigmoid gates ---
    out_h = jax.nn.sigmoid(
        jnp.dot(w2_ref[...], y[:, :H], preferred_element_type=jnp.float32) + b2)   # (Cb, H)
    out_w = jax.nn.sigmoid(
        jnp.dot(w3_ref[...], y[:, H:], preferred_element_type=jnp.float32) + b3)   # (Cb, W)

    # --- expand gates back to (Cb, HWp) and apply: short * out_w * out_h ---
    gate_h = jnp.dot(out_h, mh_ref[...], preferred_element_type=jnp.float32)   # (Cb, HWp)
    gate_w = jnp.dot(out_w, mw_ref[...], preferred_element_type=jnp.float32)   # (Cb, HWp)
    o_ref[...] = x2d * gate_w * gate_h


def _pick_batch_tile(B, C, max_bt=8):
    """Largest divisor of B (<= max_bt) whose output block rows satisfy the (8,128)
    alignment rule and that still leaves >= 2 grid steps when possible (megacore)."""
    def ok(bt):
        return (bt * C) % 8 == 0 or bt == B
    divisors = [bt for bt in range(1, min(B, max_bt) + 1) if B % bt == 0 and ok(bt)]
    if not divisors:
        return B                      # whole batch per step (block equals full array dim)
    pref = [bt for bt in divisors if B // bt >= 2]
    return max(pref) if pref else max(divisors)


def coord_attention(x, params, batch_tile=None):
    B, C, H, W = x.shape
    HW = H * W
    temp_c = params["w1"].shape[0]
    assert params["w1"].shape[1] == C
    assert params["w2"].shape[0] == C, "out_channels must equal in_channels for short*gate"

    Bt = batch_tile if batch_tile is not None else _pick_batch_tile(B, C)
    assert B % Bt == 0

    # Lane-dense: pad the flattened spatial dim to a multiple of 128.
    HWp = max(128, ((HW + 127) // 128) * 128)
    pad = HWp - HW

    x2d = x.reshape(B * C, HW).astype(jnp.float32)
    if pad:
        x2d = jnp.pad(x2d, ((0, 0), (0, pad)))

    # ---- constants, built once in the wrapper (hoisted out of the kernel) ----
    hw_idx = jnp.arange(HW)
    mh = (hw_idx[None, :] // W == jnp.arange(H)[:, None]).astype(jnp.float32)   # (H, HW)
    mw = (hw_idx[None, :] % W == jnp.arange(W)[:, None]).astype(jnp.float32)    # (W, HW)
    m_pool = jnp.concatenate([mh.T * (1.0 / W), mw.T * (1.0 / H)], axis=1)      # (HW, H+W)
    if pad:
        mh = jnp.pad(mh, ((0, 0), (0, pad)))
        mw = jnp.pad(mw, ((0, 0), (0, pad)))
        m_pool = jnp.pad(m_pool, ((0, pad), (0, 0)))

    # Fold BN (inference mode) into conv1.
    eps = 1e-5
    s1 = params["bn_gamma"] / jnp.sqrt(params["bn_var"] + eps)
    t1 = params["bn_beta"] - params["bn_mean"] * s1
    w1f = params["w1"] * s1[:, None]
    b1f = params["b1"] * s1 + t1

    # Block-diagonal (batch-shared) weights: one matmul covers all Bt elements per step.
    eye = jnp.eye(Bt, dtype=jnp.float32)
    w1b = jnp.kron(eye, w1f)                  # (Bt*temp_c, Bt*C)
    w2b = jnp.kron(eye, params["w2"])         # (Bt*C,     Bt*temp_c)
    w3b = jnp.kron(eye, params["w3"])         # (Bt*C,     Bt*temp_c)

    Cb, TCb = Bt * C, Bt * temp_c
    rows = max(Cb, TCb)
    bias = jnp.zeros((rows, 3), jnp.float32)
    bias = bias.at[:TCb, 0].set(jnp.tile(b1f, Bt))
    bias = bias.at[:Cb, 1].set(jnp.tile(params["b2"], Bt))
    bias = bias.at[:Cb, 2].set(jnp.tile(params["b3"], Bt))

    def const2d(shape):
        return pl.BlockSpec(shape, lambda b: (0, 0))

    out = pl.pallas_call(
        _coord_attn_kernel,
        out_shape=jax.ShapeDtypeStruct((B * C, HWp), jnp.float32),
        grid_spec=pltpu.PrefetchScalarGridSpec(
            num_scalar_prefetch=0,
            grid=(B // Bt,),
            in_specs=[
                pl.BlockSpec((Cb, HWp), lambda b: (b, 0)),         # x (flattened)
                const2d((HWp, H + W)),                             # fused pooling matrix
                const2d((H, HWp)),                                 # Mh expansion
                const2d((W, HWp)),                                 # Mw expansion
                const2d((TCb, Cb)),                                # conv1 (BN folded, block-diag)
                const2d((Cb, TCb)),                                # conv2 (block-diag)
                const2d((Cb, TCb)),                                # conv3 (block-diag)
                const2d((rows, 3)),                                # packed biases
            ],
            out_specs=pl.BlockSpec((Cb, HWp), lambda b: (b, 0)),
        ),
        compiler_params=pltpu.CompilerParams(dimension_semantics=("parallel",)),
    )(x2d, m_pool, mh, mw, w1b, w2b, w3b, bias)

    out = out[:, :HW].reshape(B, C, H, W)
    return out


def reference(x, params):
    """Pure-JAX reference matching the PyTorch CoordAttention forward (BN in eval mode)."""
    B, C, H, W = x.shape
    x_h = x.mean(axis=3)                          # (B, C, H)   pool_h
    x_w = x.mean(axis=2)                          # (B, C, W)   pool_w (already "permuted")
    x_cat = jnp.concatenate([x_h, x_w], axis=2)   # (B, C, H+W)
    y = jnp.einsum("tc,bcn->btn", params["w1"], x_cat) + params["b1"][None, :, None]
    eps = 1e-5
    scale = params["bn_gamma"] / jnp.sqrt(params["bn_var"] + eps)
    shift = params["bn_beta"] - params["bn_mean"] * scale
    y = y * scale[None, :, None] + shift[None, :, None]
    y = y * jnp.clip(y + 3.0, 0.0, 6.0) / 6.0     # h_swish
    a_h, a_w = y[:, :, :H], y[:, :, H:]
    out_h = jax.nn.sigmoid(jnp.einsum("ct,btn->bcn", params["w2"], a_h) + params["b2"][None, :, None])
    out_w = jax.nn.sigmoid(jnp.einsum("ct,btn->bcn", params["w3"], a_w) + params["b3"][None, :, None])
    return x * out_w[:, :, None, :] * out_h[:, :, :, None]


def init_params(key, in_channels, reduction=32):
    temp_c = max(8, in_channels // reduction)
    ks = jax.random.split(key, 10)
    return {
        "w1": 0.1 * jax.random.normal(ks[0], (temp_c, in_channels), jnp.float32),
        "b1": 0.1 * jax.random.normal(ks[1], (temp_c,), jnp.float32),
        "bn_gamma": 1.0 + 0.1 * jax.random.normal(ks[2], (temp_c,), jnp.float32),
        "bn_beta": 0.1 * jax.random.normal(ks[3], (temp_c,), jnp.float32),
        "bn_mean": 0.1 * jax.random.normal(ks[4], (temp_c,), jnp.float32),
        "bn_var": 0.5 + jax.random.uniform(ks[5], (temp_c,), jnp.float32),
        "w2": 0.1 * jax.random.normal(ks[6], (in_channels, temp_c), jnp.float32),
        "b2": 0.1 * jax.random.normal(ks[7], (in_channels,), jnp.float32),
        "w3": 0.1 * jax.random.normal(ks[8], (in_channels, temp_c), jnp.float32),
        "b3": 0.1 * jax.random.normal(ks[9], (in_channels,), jnp.float32),
    }


if __name__ == "__main__":
    key = jax.random.PRNGKey(0)
    kx, kp = jax.random.split(key)

    B, C, H, W = 2, 16, 16, 16          # in_channels = out_channels = 16, HW = 256 (lane-dense)
    x = jax.random.normal(kx, (B, C, H, W), jnp.float32)
    params = init_params(kp, C)

    out = coord_attention(x, params)    # Bt=1 per grid step, grid=(2,), megacore-parallel
    out = jax.block_until_ready(out)

    ref = reference(x, params)
    assert out.shape == (B, C, H, W)
    assert jnp.allclose(out, ref, rtol=1e-5, atol=1e-5), (
        f"max abs err = {jnp.max(jnp.abs(out - ref))}")

    print("KERNEL_OK")
</pallas_src>

<mosaic_0001>
module attributes {stable_mosaic.version = 11 : i64} {
  func.func @_coord_attn_kernel(%arg0: i32, %arg1: memref<16x256xf32, #tpu.memory_space<vmem>>, %arg2: memref<256x32xf32, #tpu.memory_space<vmem>>, %arg3: memref<16x256xf32, #tpu.memory_space<vmem>>, %arg4: memref<16x256xf32, #tpu.memory_space<vmem>>, %arg5: memref<8x16xf32, #tpu.memory_space<vmem>>, %arg6: memref<16x8xf32, #tpu.memory_space<vmem>>, %arg7: memref<16x8xf32, #tpu.memory_space<vmem>>, %arg8: memref<16x3xf32, #tpu.memory_space<vmem>>, %arg9: memref<16x256xf32, #tpu.memory_space<vmem>>) attributes {dimension_semantics = [#tpu.dimension_semantics<parallel>], iteration_bounds = array<i64: 2>, scalar_prefetch = 0 : i64, scratch_operands = 0 : i64, tpu.core_type = #tpu.core_type<tc>, window_params = [{transform_indices = @transform_0, window_bounds = array<i64: 16, 256>}, {pipeline_mode = #tpu.pipeline_mode<synchronous>, transform_indices = @transform_1, window_bounds = array<i64: 256, 32>}, {pipeline_mode = #tpu.pipeline_mode<synchronous>, transform_indices = @transform_2, window_bounds = array<i64: 16, 256>}, {pipeline_mode = #tpu.pipeline_mode<synchronous>, transform_indices = @transform_3, window_bounds = array<i64: 16, 256>}, {pipeline_mode = #tpu.pipeline_mode<synchronous>, transform_indices = @transform_4, window_bounds = array<i64: 8, 16>}, {pipeline_mode = #tpu.pipeline_mode<synchronous>, transform_indices = @transform_5, window_bounds = array<i64: 16, 8>}, {pipeline_mode = #tpu.pipeline_mode<synchronous>, transform_indices = @transform_6, window_bounds = array<i64: 16, 8>}, {pipeline_mode = #tpu.pipeline_mode<synchronous>, transform_indices = @transform_7, window_bounds = array<i64: 16, 3>}, {transform_indices = @transform_8, window_bounds = array<i64: 16, 256>}]} {
    %c0 = arith.constant 0 : index
    %c0_0 = arith.constant 0 : index
    %0 = vector.load %arg1[%c0, %c0_0] : memref<16x256xf32, #tpu.memory_space<vmem>>, vector<16x256xf32>
    %c0_1 = arith.constant 0 : index
    %c0_2 = arith.constant 0 : index
    %1 = vector.load %arg2[%c0_1, %c0_2] : memref<256x32xf32, #tpu.memory_space<vmem>>, vector<256x32xf32>
    %cst = arith.constant dense<0.000000e+00> : vector<16x32xf32>
    %2 = tpu.matmul %0, %1, %cst {dimension_numbers = #tpu.dot_dimension_numbers<[1], [0], [0], [1], [0, 0, 1, 1], [], []>} : vector<16x256xf32>, vector<256x32xf32>, vector<16x32xf32> -> vector<16x32xf32>
    %c0_3 = arith.constant 0 : index
    %c0_4 = arith.constant 0 : index
    %3 = vector.load %arg8[%c0_3, %c0_4] : memref<16x3xf32, #tpu.memory_space<vmem>>, vector<16x3xf32>
    %4 = vector.extract_strided_slice %3 {offsets = [0, 0], sizes = [8, 1], strides = [1, 1]} : vector<16x3xf32> to vector<8x1xf32>
    %5 = vector.extract_strided_slice %3 {offsets = [0, 1], sizes = [16, 1], strides = [1, 1]} : vector<16x3xf32> to vector<16x1xf32>
    %6 = vector.extract_strided_slice %3 {offsets = [0, 2], sizes = [16, 1], strides = [1, 1]} : vector<16x3xf32> to vector<16x1xf32>
    %c0_5 = arith.constant 0 : index
    %c0_6 = arith.constant 0 : index
    %7 = vector.load %arg5[%c0_5, %c0_6] : memref<8x16xf32, #tpu.memory_space<vmem>>, vector<8x16xf32>
    %cst_7 = arith.constant dense<0.000000e+00> : vector<8x32xf32>
    %8 = tpu.matmul %7, %2, %cst_7 {dimension_numbers = #tpu.dot_dimension_numbers<[1], [0], [0], [1], [0, 0, 1, 1], [], []>} : vector<8x16xf32>, vector<16x32xf32>, vector<8x32xf32> -> vector<8x32xf32>
    %9 = vector.broadcast %4 : vector<8x1xf32> to vector<8x32xf32>
    %10 = arith.addf %8, %9 : vector<8x32xf32>
    %cst_8 = arith.constant 3.000000e+00 : f32
    %11 = vector.broadcast %cst_8 : f32 to vector<8x32xf32>
    %12 = arith.addf %10, %11 : vector<8x32xf32>
    %cst_9 = arith.constant 0.000000e+00 : f32
    %cst_10 = arith.constant 6.000000e+00 : f32
    %13 = vector.broadcast %cst_9 : f32 to vector<8x32xf32>
    %14 = arith.maximumf %13, %12 : vector<8x32xf32>
    %15 = vector.broadcast %cst_10 : f32 to vector<8x32xf32>
    %16 = arith.minimumf %15, %14 : vector<8x32xf32>
    %17 = arith.mulf %10, %16 : vector<8x32xf32>
    %cst_11 = arith.constant 0.166666672 : f32
    %18 = vector.broadcast %cst_11 : f32 to vector<8x32xf32>
    %19 = arith.mulf %17, %18 : vector<8x32xf32>
    %c0_12 = arith.constant 0 : index
    %c0_13 = arith.constant 0 : index
    %20 = vector.load %arg6[%c0_12, %c0_13] : memref<16x8xf32, #tpu.memory_space<vmem>>, vector<16x8xf32>
    %21 = vector.extract_strided_slice %19 {offsets = [0, 0], sizes = [8, 16], strides = [1, 1]} : vector<8x32xf32> to vector<8x16xf32>
    %cst_14 = arith.constant dense<0.000000e+00> : vector<16x16xf32>
    %22 = tpu.matmul %20, %21, %cst_14 {dimension_numbers = #tpu.dot_dimension_numbers<[1], [0], [0], [1], [0, 0, 1, 1], [], []>} : vector<16x8xf32>, vector<8x16xf32>, vector<16x16xf32> -> vector<16x16xf32>
    %23 = vector.broadcast %5 : vector<16x1xf32> to vector<16x16xf32>
    %24 = arith.addf %22, %23 : vector<16x16xf32>
    %25 = arith.negf %24 : vector<16x16xf32>
    %26 = math.exp %25 : vector<16x16xf32>
    %cst_15 = arith.constant 1.000000e+00 : f32
    %27 = vector.broadcast %cst_15 : f32 to vector<16x16xf32>
    %28 = arith.addf %27, %26 : vector<16x16xf32>
    %29 = arith.divf %27, %28 : vector<16x16xf32>
    %c0_16 = arith.constant 0 : index
    %c0_17 = arith.constant 0 : index
    %30 = vector.load %arg7[%c0_16, %c0_17] : memref<16x8xf32, #tpu.memory_space<vmem>>, vector<16x8xf32>
    %31 = vector.extract_strided_slice %19 {offsets = [0, 16], sizes = [8, 16], strides = [1, 1]} : vector<8x32xf32> to vector<8x16xf32>
    %cst_18 = arith.constant dense<0.000000e+00> : vector<16x16xf32>
    %32 = tpu.matmul %30, %31, %cst_18 {dimension_numbers = #tpu.dot_dimension_numbers<[1], [0], [0], [1], [0, 0, 1, 1], [], []>} : vector<16x8xf32>, vector<8x16xf32>, vector<16x16xf32> -> vector<16x16xf32>
    %33 = vector.broadcast %6 : vector<16x1xf32> to vector<16x16xf32>
    %34 = arith.addf %32, %33 : vector<16x16xf32>
    %35 = arith.negf %34 : vector<16x16xf32>
    %36 = math.exp %35 : vector<16x16xf32>
    %cst_19 = arith.constant 1.000000e+00 : f32
    %37 = vector.broadcast %cst_19 : f32 to vector<16x16xf32>
    %38 = arith.addf %37, %36 : vector<16x16xf32>
    %39 = arith.divf %37, %38 : vector<16x16xf32>
    %c0_20 = arith.constant 0 : index
    %c0_21 = arith.constant 0 : index
    %40 = vector.load %arg3[%c0_20, %c0_21] : memref<16x256xf32, #tpu.memory_space<vmem>>, vector<16x256xf32>
    %cst_22 = arith.constant dense<0.000000e+00> : vector<16x256xf32>
    %41 = tpu.matmul %29, %40, %cst_22 {dimension_numbers = #tpu.dot_dimension_numbers<[1], [0], [0], [1], [0, 0, 1, 1], [], []>} : vector<16x16xf32>, vector<16x256xf32>, vector<16x256xf32> -> vector<16x256xf32>
    %c0_23 = arith.constant 0 : index
    %c0_24 = arith.constant 0 : index
    %42 = vector.load %arg4[%c0_23, %c0_24] : memref<16x256xf32, #tpu.memory_space<vmem>>, vector<16x256xf32>
    %cst_25 = arith.constant dense<0.000000e+00> : vector<16x256xf32>
    %43 = tpu.matmul %39, %42, %cst_25 {dimension_numbers = #tpu.dot_dimension_numbers<[1], [0], [0], [1], [0, 0, 1, 1], [], []>} : vector<16x16xf32>, vector<16x256xf32>, vector<16x256xf32> -> vector<16x256xf32>
    %44 = arith.mulf %0, %43 : vector<16x256xf32>
    %45 = arith.mulf %44, %41 : vector<16x256xf32>
    %c0_26 = arith.constant 0 : index
    %c0_27 = arith.constant 0 : index
    %46 = vector.load %arg9[%c0_26, %c0_27] : memref<16x256xf32, #tpu.memory_space<vmem>>, vector<16x256xf32>
    tpu.vector_store %arg9[%c0_26, %c0_27], %45 {strides = array<i32>} : memref<16x256xf32, #tpu.memory_space<vmem>>, vector<16x256xf32>,
    return
  }
  func.func @transform_0(%arg0: i32) -> (i32, i32) {
    %c0_i32 = arith.constant 0 : i32
    %c0_i32_0 = arith.constant 0 : i32
    return %arg0, %c0_i32 : i32, i32
  }
  func.func @transform_1(%arg0: i32) -> (i32, i32) {
    %c0_i32 = arith.constant 0 : i32
    %c0_i32_0 = arith.constant 0 : i32
    %c0_i32_1 = arith.constant 0 : i32
    return %c0_i32, %c0_i32_0 : i32, i32
  }
  func.func @transform_2(%arg0: i32) -> (i32, i32) {
    %c0_i32 = arith.constant 0 : i32
    %c0_i32_0 = arith.constant 0 : i32
    %c0_i32_1 = arith.constant 0 : i32
    return %c0_i32, %c0_i32_0 : i32, i32
  }
  func.func @transform_3(%arg0: i32) -> (i32, i32) {
    %c0_i32 = arith.constant 0 : i32
    %c0_i32_0 = arith.constant 0 : i32
    %c0_i32_1 = arith.constant 0 : i32
    return %c0_i32, %c0_i32_0 : i32, i32
  }
  func.func @transform_4(%arg0: i32) -> (i32, i32) {
    %c0_i32 = arith.constant 0 : i32
    %c0_i32_0 = arith.constant 0 : i32
    %c0_i32_1 = arith.constant 0 : i32
    return %c0_i32, %c0_i32_0 : i32, i32
  }
  func.func @transform_5(%arg0: i32) -> (i32, i32) {
    %c0_i32 = arith.constant 0 : i32
    %c0_i32_0 = arith.constant 0 : i32
    %c0_i32_1 = arith.constant 0 : i32
    return %c0_i32, %c0_i32_0 : i32, i32
  }
  func.func @transform_6(%arg0: i32) -> (i32, i32) {
    %c0_i32 = arith.constant 0 : i32
    %c0_i32_0 = arith.constant 0 : i32
    %c0_i32_1 = arith.constant 0 : i32
    return %c0_i32, %c0_i32_0 : i32, i32
  }
  func.func @transform_7(%arg0: i32) -> (i32, i32) {
    %c0_i32 = arith.constant 0 : i32
    %c0_i32_0 = arith.constant 0 : i32
    %c0_i32_1 = arith.constant 0 : i32
    return %c0_i32, %c0_i32_0 : i32, i32
  }
  func.func @transform_8(%arg0: i32) -> (i32, i32) {
    %c0_i32 = arith.constant 0 : i32
    %c0_i32_0 = arith.constant 0 : i32
    return %arg0, %c0_i32 : i32, i32
  }
}

</mosaic_0001>

<llo_original>
// kernel: tpu_custom_call.1
$region0: #{tpu_custom_call.1}
  #allocation0 [shape = 'u32[]', space=smem, size = 0x4, offset = 0x4, fixed_abs, tag = 'smem constant byte address 0x4 - core index']
  #allocation1 [shape = 'u32[72,128]{1,0:T(1,128)}', space=vmem, size = 0x9000, scoped, tag = 'internal scratch']
  %s0 = inlined_call_operand.vmem [shape: f32[32,256], index: 0, kind: input, shape index: {}]
  %s1 = inlined_call_operand.vmem [shape: f32[256,32], index: 1, kind: input, shape index: {}]
  %s2 = inlined_call_operand.vmem [shape: f32[16,256], index: 2, kind: input, shape index: {}]
  %s3 = inlined_call_operand.vmem [shape: f32[16,256], index: 3, kind: input, shape index: {}]
  %s4 = inlined_call_operand.vmem [shape: f32[8,16], index: 4, kind: input, shape index: {}]
  %s5 = inlined_call_operand.vmem [shape: f32[16,8], index: 5, kind: input, shape index: {}]
  %s6 = inlined_call_operand.vmem [shape: f32[16,8], index: 6, kind: input, shape index: {}]
  %s7 = inlined_call_operand.vmem [shape: f32[16,3], index: 7, kind: input, shape index: {}]
  %s8 = inlined_call_operand.hbm [shape: f32[32,256], index: 8, kind: output, shape index: {}]
  %s9 = sld [smem:[#allocation0]]
  $region65: #{tpu_custom_call.1} parent=0
    _
  %s11 = ssub.s32 1, %s9
  %s12 = scalar_select 0, %s11, %s9
  $region1: #{tpu_custom_call.1} parent=0
    #allocation2 [shape = 'u8[32768]{0}', space=vmem, size = 0x8000, scoped, tag = 'output window, operand 0']
    #allocation3 [shape = 's32[2]{0}', space=sflag, size = 0x8, scoped, tag = 'scoped memory for tpu_custom_call.1']
    %13 = vsyncpa [#allocation3], 0
    %s14 = scalar_lea.sflag [#allocation3], 1
    %15 = vsyncpa %s14, 0
    loop: start=0, step=1, limit=4
    $region2: #{tpu_custom_call.1} parent=1 // loop_pre_header
      _
    $region3: #{tpu_custom_call.1} parent=1 // loop_header
      %s17 = sphi 0, %s21
      %p18 = scmp.ge.s32.totalorder %s17, 4
      %s27 = sphi 0, %s29
      %s30 = sphi 0, %s27
      %s31 = sphi 0, %s30
      %s47 = sphi 0, %s31
      %s51 = sphi 0, %s51
      %s53 = sphi 0, %s51
      %s54 = sphi 0, %s53
      %s68 = sphi 0, %s54
      %s72 = sphi 0, %s72
      %s74 = sphi 0, %s72
      %s75 = sphi 0, %s74
      %s89 = sphi 0, %s75
      %s93 = sphi 0, %s93
      %s95 = sphi 0, %s93
      %s96 = sphi 0, %s95
      %s110 = sphi 0, %s96
      %s114 = sphi 0, %s114
      %s116 = sphi 0, %s114
      %s117 = sphi 0, %s116
      %s131 = sphi 0, %s117
      %s135 = sphi 0, %s135
      %s137 = sphi 0, %s135
      %s138 = sphi 0, %s137
      %s152 = sphi 0, %s138
      %s156 = sphi 0, %s156
      %s158 = sphi 0, %s156
      %s159 = sphi 0, %s158
      %s173 = sphi 0, %s159
      %s177 = sphi 0, %s177
      %s179 = sphi 0, %s177
      %s180 = sphi 0, %s179
      %s194 = sphi 0, %s180
      %s200 = sphi 0, %s202
      %s203 = sphi 0, %s200
      %s204 = sphi 0, %s203
      %s220 = sphi 0, %s204
    $region4: #{tpu_custom_call.1} parent=1 // loop_header_branch
      %20 = sbr.rel (%p18) target = $region8
    $region5: #{tpu_custom_call.1} parent=1 // loop_body
      %s22 = ssub.s32 %s17, 1
      %s23 = ssub.s32 %s17, 2
      %s24 = sadd.s32 %s17, 1
      %s25 = ssub.s32 %s17, %s24
      %p26 = scmp.eq.s32.totalorder %s25, 0
      %s28 = sadd.s32 %s27, 1
      %s29 = scalar_select %p26, %s27, %s28
      %p32 = pneg %p26
      %p33 = scmp.eq.s32.totalorder %s17, 1
      %p34 = por %p32, %p33
      %p35 = scmp.ne.s32.totalorder %s27, %s30
      %p36 = scmp.eq.s32.totalorder %s17, 0
      %p37 = por %p35, %p36
      %p38 = scmp.ne.s32.totalorder %s27, %s30
      %p39 = scmp.eq.s32.totalorder %s22, 1
      %p40 = por %p38, %p39
      %p41 = scmp.ne.s32.totalorder %s30, %s31
      %p42 = scmp.eq.s32.totalorder %s22, 0
      %p43 = por %p41, %p42
      %p44 = scmp.ne.s32.totalorder %s30, %s31
      %p45 = scmp.eq.s32.totalorder %s23, 1
      %p46 = por %p44, %p45
      %p48 = scmp.ne.s32.totalorder %s31, %s47
      %p49 = scmp.eq.s32.totalorder %s23, 0
      %p50 = por %p48, %p49
      %s52 = sadd.s32 %s51, 1
      %p55 = scmp.eq.s32.totalorder %s17, 1
      %p56 = scmp.ne.s32.totalorder %s51, %s53
      %p57 = scmp.eq.s32.totalorder %s17, 0
      %p58 = por %p56, %p57
      %p59 = scmp.ne.s32.totalorder %s51, %s53
      %p60 = scmp.eq.s32.totalorder %s22, 1
      %p61 = por %p59, %p60
      %p62 = scmp.ne.s32.totalorder %s53, %s54
      %p63 = scmp.eq.s32.totalorder %s22, 0
      %p64 = por %p62, %p63
      %p65 = scmp.ne.s32.totalorder %s53, %s54
      %p66 = scmp.eq.s32.totalorder %s23, 1
      %p67 = por %p65, %p66
      %p69 = scmp.ne.s32.totalorder %s54, %s68
      %p70 = scmp.eq.s32.totalorder %s23, 0
      %p71 = por %p69, %p70
      %s73 = sadd.s32 %s72, 1
      %p76 = scmp.eq.s32.totalorder %s17, 1
      %p77 = scmp.ne.s32.totalorder %s72, %s74
      %p78 = scmp.eq.s32.totalorder %s17, 0
      %p79 = por %p77, %p78
      %p80 = scmp.ne.s32.totalorder %s72, %s74
      %p81 = scmp.eq.s32.totalorder %s22, 1
      %p82 = por %p80, %p81
      %p83 = scmp.ne.s32.totalorder %s74, %s75
      %p84 = scmp.eq.s32.totalorder %s22, 0
      %p85 = por %p83, %p84
      %p86 = scmp.ne.s32.totalorder %s74, %s75
      %p87 = scmp.eq.s32.totalorder %s23, 1
      %p88 = por %p86, %p87
      %p90 = scmp.ne.s32.totalorder %s75, %s89
      %p91 = scmp.eq.s32.totalorder %s23, 0
      %p92 = por %p90, %p91
      %s94 = sadd.s32 %s93, 1
      %p97 = scmp.eq.s32.totalorder %s17, 1
      %p98 = scmp.ne.s32.totalorder %s93, %s95
      %p99 = scmp.eq.s32.totalorder %s17, 0
      %p100 = por %p98, %p99
      %p101 = scmp.ne.s32.totalorder %s93, %s95
      %p102 = scmp.eq.s32.totalorder %s22, 1
      %p103 = por %p101, %p102
      %p104 = scmp.ne.s32.totalorder %s95, %s96
      %p105 = scmp.eq.s32.totalorder %s22, 0
      %p106 = por %p104, %p105
      %p107 = scmp.ne.s32.totalorder %s95, %s96
      %p108 = scmp.eq.s32.totalorder %s23, 1
      %p109 = por %p107, %p108
      %p111 = scmp.ne.s32.totalorder %s96, %s110
      %p112 = scmp.eq.s32.totalorder %s23, 0
      %p113 = por %p111, %p112
      %s115 = sadd.s32 %s114, 1
      %p118 = scmp.eq.s32.totalorder %s17, 1
      %p119 = scmp.ne.s32.totalorder %s114, %s116
      %p120 = scmp.eq.s32.totalorder %s17, 0
      %p121 = por %p119, %p120
      %p122 = scmp.ne.s32.totalorder %s114, %s116
      %p123 = scmp.eq.s32.totalorder %s22, 1
      %p124 = por %p122, %p123
      %p125 = scmp.ne.s32.totalorder %s116, %s117
      %p126 = scmp.eq.s32.totalorder %s22, 0
      %p127 = por %p125, %p126
      %p128 = scmp.ne.s32.totalorder %s116, %s117
      %p129 = scmp.eq.s32.totalorder %s23, 1
      %p130 = por %p128, %p129
      %p132 = scmp.ne.s32.totalorder %s117, %s131
      %p133 = scmp.eq.s32.totalorder %s23, 0
      %p134 = por %p132, %p133
      %s136 = sadd.s32 %s135, 1
      %p139 = scmp.eq.s32.totalorder %s17, 1
      %p140 = scmp.ne.s32.totalorder %s135, %s137
      %p141 = scmp.eq.s32.totalorder %s17, 0
      %p142 = por %p140, %p141
      %p143 = scmp.ne.s32.totalorder %s135, %s137
      %p144 = scmp.eq.s32.totalorder %s22, 1
      %p145 = por %p143, %p144
      %p146 = scmp.ne.s32.totalorder %s137, %s138
      %p147 = scmp.eq.s32.totalorder %s22, 0
      %p148 = por %p146, %p147
      %p149 = scmp.ne.s32.totalorder %s137, %s138
      %p150 = scmp.eq.s32.totalorder %s23, 1
      %p151 = por %p149, %p150
      %p153 = scmp.ne.s32.totalorder %s138, %s152
      %p154 = scmp.eq.s32.totalorder %s23, 0
      %p155 = por %p153, %p154
      %s157 = sadd.s32 %s156, 1
      %p160 = scmp.eq.s32.totalorder %s17, 1
      %p161 = scmp.ne.s32.totalorder %s156, %s158
      %p162 = scmp.eq.s32.totalorder %s17, 0
      %p163 = por %p161, %p162
      %p164 = scmp.ne.s32.totalorder %s156, %s158
      %p165 = scmp.eq.s32.totalorder %s22, 1
      %p166 = por %p164, %p165
      %p167 = scmp.ne.s32.totalorder %s158, %s159
      %p168 = scmp.eq.s32.totalorder %s22, 0
      %p169 = por %p167, %p168
      %p170 = scmp.ne.s32.totalorder %s158, %s159
      %p171 = scmp.eq.s32.totalorder %s23, 1
      %p172 = por %p170, %p171
      %p174 = scmp.ne.s32.totalorder %s159, %s173
      %p175 = scmp.eq.s32.totalorder %s23, 0
      %p176 = por %p174, %p175
      %s178 = sadd.s32 %s177, 1
      %p181 = scmp.eq.s32.totalorder %s17, 1
      %p182 = scmp.ne.s32.totalorder %s177, %s179
      %p183 = scmp.eq.s32.totalorder %s17, 0
      %p184 = por %p182, %p183
      %p185 = scmp.ne.s32.totalorder %s177, %s179
      %p186 = scmp.eq.s32.totalorder %s22, 1
      %p187 = por %p185, %p186
      %p188 = scmp.ne.s32.totalorder %s179, %s180
      %p189 = scmp.eq.s32.totalorder %s22, 0
      %p190 = por %p188, %p189
      %p191 = scmp.ne.s32.totalorder %s179, %s180
      %p192 = scmp.eq.s32.totalorder %s23, 1
      %p193 = por %p191, %p192
      %p195 = scmp.ne.s32.totalorder %s180, %s194
      %p196 = scmp.eq.s32.totalorder %s23, 0
      %p197 = por %p195, %p196
      %s198 = ssub.s32 %s17, %s24
      %p199 = scmp.eq.s32.totalorder %s198, 0
      %s201 = sadd.s32 %s200, 1
      %s202 = scalar_select %p199, %s200, %s201
      %p205 = pneg %p199
      %p206 = scmp.eq.s32.totalorder %s17, 1
      %p207 = por %p205, %p206
      %p208 = scmp.ne.s32.totalorder %s200, %s203
      %p209 = scmp.eq.s32.totalorder %s17, 0
      %p210 = por %p208, %p209
      %p211 = scmp.ne.s32.totalorder %s200, %s203
      %p212 = scmp.eq.s32.totalorder %s22, 1
      %p213 = por %p211, %p212
      %p214 = scmp.ne.s32.totalorder %s203, %s204
      %p215 = scmp.eq.s32.totalorder %s22, 0
      %p216 = por %p214, %p215
      %p217 = scmp.ne.s32.totalorder %s203, %s204
      %p218 = scmp.eq.s32.totalorder %s23, 1
      %p219 = por %p217, %p218
      %p221 = scmp.ne.s32.totalorder %s204, %s220
      %p222 = scmp.eq.s32.totalorder %s23, 0
      %p223 = por %p221, %p222
      %p224 = scmp.le.s32.totalorder 1, %s17
      %p225 = scmp.lt.s32.totalorder %s17, 3
      %p226 = pnand %p224, %p225
      %p227 = pneg %p226
      // Predicated region
      $region9: #{tpu_custom_call.1} parent=5 // pred_check
        _
      $region10: #{tpu_custom_call.1} parent=5 // pred_check_branch
        %229 = sbr.rel (%p226) target = $region12
      $region11: #{tpu_custom_call.1} parent=5 // pred_region
        %s230 = ssub.s32 %s17, 1
        // Predicated region
        $region13: #{tpu_custom_call.1} parent=11 // pred_check
          %p231 = pneg %p64
        $region14: #{tpu_custom_call.1} parent=11 // pred_check_branch
          %233 = sbr.rel (%p231) target = $region16
        $region15: #{tpu_custom_call.1} parent=11 // pred_region
          _
        $region16: #{tpu_custom_call.1} parent=11 // pred_fallthru
          _
        // Predicated region
        $region17: #{tpu_custom_call.1} parent=11 // pred_check
          %p234 = pneg %p85
        $region18: #{tpu_custom_call.1} parent=11 // pred_check_branch
          %236 = sbr.rel (%p234) target = $region20
        $region19: #{tpu_custom_call.1} parent=11 // pred_region
          _
        $region20: #{tpu_custom_call.1} parent=11 // pred_fallthru
          _
        // Predicated region
        $region21: #{tpu_custom_call.1} parent=11 // pred_check
          %p237 = pneg %p106
        $region22: #{tpu_custom_call.1} parent=11 // pred_check_branch
          %239 = sbr.rel (%p237) target = $region24
        $region23: #{tpu_custom_call.1} parent=11 // pred_region
          _
        $region24: #{tpu_custom_call.1} parent=11 // pred_fallthru
          _
        // Predicated region
        $region25: #{tpu_custom_call.1} parent=11 // pred_check
          %p240 = pneg %p127
        $region26: #{tpu_custom_call.1} parent=11 // pred_check_branch
          %242 = sbr.rel (%p240) target = $region28
        $region27: #{tpu_custom_call.1} parent=11 // pred_region
          _
        $region28: #{tpu_custom_call.1} parent=11 // pred_fallthru
          _
        // Predicated region
        $region29: #{tpu_custom_call.1} parent=11 // pred_check
          %p243 = pneg %p148
        $region30: #{tpu_custom_call.1} parent=11 // pred_check_branch
          %245 = sbr.rel (%p243) target = $region32
        $region31: #{tpu_custom_call.1} parent=11 // pred_region
          _
        $region32: #{tpu_custom_call.1} parent=11 // pred_fallthru
          _
        // Predicated region
        $region33: #{tpu_custom_call.1} parent=11 // pred_check
          %p246 = pneg %p169
        $region34: #{tpu_custom_call.1} parent=11 // pred_check_branch
          %248 = sbr.rel (%p246) target = $region36
        $region35: #{tpu_custom_call.1} parent=11 // pred_region
          _
        $region36: #{tpu_custom_call.1} parent=11 // pred_fallthru
          _
        // Predicated region
        $region37: #{tpu_custom_call.1} parent=11 // pred_check
          %p249 = pneg %p190
        $region38: #{tpu_custom_call.1} parent=11 // pred_check_branch
          %251 = sbr.rel (%p249) target = $region40
        $region39: #{tpu_custom_call.1} parent=11 // pred_region
          _
        $region40: #{tpu_custom_call.1} parent=11 // pred_fallthru
          _
      $region12: #{tpu_custom_call.1} parent=5 // pred_fallthru
        _
      %p252 = scmp.lt.s32.totalorder %s17, 2
      // Predicated region
      $region41: #{tpu_custom_call.1} parent=5 // pred_check
        %p253 = pneg %p252
      $region42: #{tpu_custom_call.1} parent=5 // pred_check_branch
        %255 = sbr.rel (%p253) target = $region44
      $region43: #{tpu_custom_call.1} parent=5 // pred_region
        // Predicated region
        $region45: #{tpu_custom_call.1} parent=43 // pred_check
          %p256 = pneg %p37
        $region46: #{tpu_custom_call.1} parent=43 // pred_check_branch
          %258 = sbr.rel (%p256) target = $region48
        $region47: #{tpu_custom_call.1} parent=43 // pred_region
          %s259 = smul.u32 2, %s17
          %p260 = scmp.lt.s32.totalorder %s259, 3
          %s261 = scalar_select %p260, %s259, 3
          %s262 = smul.addr %s261, 2
          %s263 = smul.addr %s262, 8
          %s264 = scalar_lea.vmem %s0, %s263
          %s265 = smul.u32 2, %s17
        $region48: #{tpu_custom_call.1} parent=43 // pred_fallthru
          _
      $region44: #{tpu_custom_call.1} parent=5 // pred_fallthru
        _
      %p266 = scmp.le.s32.totalorder 1, %s17
      %p267 = scmp.lt.s32.totalorder %s17, 3
      %p268 = pnand %p266, %p267
      %p269 = pneg %p268
      // Predicated region
      $region49: #{tpu_custom_call.1} parent=5 // pred_check
        _
      $region50: #{tpu_custom_call.1} parent=5 // pred_check_branch
        %271 = sbr.rel (%p268) target = $region52
      $region51: #{tpu_custom_call.1} parent=5 // pred_region
        %s272 = ssub.s32 %s17, 1
        %s273 = smul.u32 2, %s22
        %p274 = scmp.lt.s32.totalorder %s273, 3
        %s275 = scalar_select %p274, %s273, 3
        %s276 = smul.addr %s275, 2
        %s277 = smul.addr %s276, 8
        %s278 = scalar_lea.vmem %s0, %s277
        %p279 = pneg %p43
        %p280 = pneg %p40
        %p281 = pneg %p64
        %p282 = pneg %p61
        %p283 = pneg %p85
        %p284 = pneg %p82
        %p285 = pneg %p106
        %p286 = pneg %p103
        %p287 = pneg %p127
        %p288 = pneg %p124
        %p289 = pneg %p148
        %p290 = pneg %p145
        %p291 = pneg %p169
        %p292 = pneg %p166
        %p293 = pneg %p190
        %p294 = pneg %p187
        %p295 = pneg %p216
        %p296 = pneg %p213
        %s297 = sand.u32 %s203, 1
        %s298 = scalar_lea.sflag [#allocation3], %s297
        %s299 = sand.u32 %s203, 1
        %s300 = smul.addr %s299, 32
        %s301 = scalar_lea.vmem [#allocation2], %s300
        %s302 = smul.u32 2, %s22
        %p303 = scmp.lt.s32.totalorder %s302, 3
        %s304 = scalar_select %p303, %s302, 3
        %s305 = smul.addr %s304, 2
        %s306 = smul.addr %s305, 8
        %s307 = scalar_lea.vmem %s0, %s306
        %s308 = smul.u32 2, %s22
        %s309 = smul.u32 2, %s22
        %v310 = vld [vmem:[%s307] sm:$0xff]
        %v311 = vld [vmem:[%s307 + $0x8] sm:$0xff]
        %v312 = vld [vmem:[%s307 + $0x10] sm:$0xff]
        %v313 = vld [vmem:[%s307 + $0x18] sm:$0xff]
        %v314 = vld [vmem:[%s1] sm:$0xff]
        %v315 = vld [vmem:[%s1 + $0x8] sm:$0xff]
        %v316 = vld [vmem:[%s1 + $0x10] sm:$0xff]
        %v317 = vld [vmem:[%s1 + $0x18] sm:$0xff]
        %v318 = vld [vmem:[%s1 + $0x20] sm:$0xff]
        %v319 = vld [vmem:[%s1 + $0x28] sm:$0xff]
        %v320 = vld [vmem:[%s1 + $0x30] sm:$0xff]
        %v321 = vld [vmem:[%s1 + $0x38] sm:$0xff]
        %v322 = vld [vmem:[%s1 + $0x40] sm:$0xff]
        %v323 = vld [vmem:[%s1 + $0x48] sm:$0xff]
        %v324 = vld [vmem:[%s1 + $0x50] sm:$0xff]
        %v325 = vld [vmem:[%s1 + $0x58] sm:$0xff]
        %v326 = vld [vmem:[%s1 + $0x60] sm:$0xff]
        %v327 = vld [vmem:[%s1 + $0x68] sm:$0xff]
        %v328 = vld [vmem:[%s1 + $0x70] sm:$0xff]
        %v329 = vld [vmem:[%s1 + $0x78] sm:$0xff]
        %v330 = vld [vmem:[%s1 + $0x80] sm:$0xff]
        %v331 = vld [vmem:[%s1 + $0x88] sm:$0xff]
        %v332 = vld [vmem:[%s1 + $0x90] sm:$0xff]
        %v333 = vld [vmem:[%s1 + $0x98] sm:$0xff]
        %v334 = vld [vmem:[%s1 + $0xa0] sm:$0xff]
        %v335 = vld [vmem:[%s1 + $0xa8] sm:$0xff]
        %v336 = vld [vmem:[%s1 + $0xb0] sm:$0xff]
        %v337 = vld [vmem:[%s1 + $0xb8] sm:$0xff]
        %v338 = vld [vmem:[%s1 + $0xc0] sm:$0xff]
        %v339 = vld [vmem:[%s1 + $0xc8] sm:$0xff]
        %v340 = vld [vmem:[%s1 + $0xd0] sm:$0xff]
        %v341 = vld [vmem:[%s1 + $0xd8] sm:$0xff]
        %v342 = vld [vmem:[%s1 + $0xe0] sm:$0xff]
        %v343 = vld [vmem:[%s1 + $0xe8] sm:$0xff]
        %v344 = vld [vmem:[%s1 + $0xf0] sm:$0xff]
        %v345 = vld [vmem:[%s1 + $0xf8] sm:$0xff]
        %346 = vmatpush.msra.mxu0 %v329
        %347 = vmatpush.msra.mxu0 %v328
        %348 = vmatpush.msra.mxu0 %v327
        %349 = vmatpush.msra.mxu0 %v326
        %350 = vmatpush.msra.mxu0 %v325
        %351 = vmatpush.msra.mxu0 %v324
        %352 = vmatpush.msra.mxu0 %v323
        %353 = vmatpush.msra.mxu0 %v322
        %354 = vmatpush.msra.mxu0 %v321
        %355 = vmatpush.msra.mxu0 %v320
        %356 = vmatpush.msra.mxu0 %v319
        %357 = vmatpush.msra.mxu0 %v318
        %358 = vmatpush.msra.mxu0 %v317
        %359 = vmatpush.msra.mxu0 %v316
        %360 = vmatpush.msra.mxu0 %v315
        %361 = vmatpush.msra.mxu0 %v314
        %362 = vmatmul.f32.gmra.mxu0 %v310
        %v363 = vpop.f32.mrf.mxu0
        %v364 = vadd.f32 0.0, %v363
        %365 = vmatmul.f32.gmra.mxu0 %v312
        %v366 = vpop.f32.mrf.mxu0
        %v367 = vadd.f32 0.0, %v366
        %368 = vdwg.mxu0
        %369 = vmatpush.msra.mxu0 %v345
        %370 = vmatpush.msra.mxu0 %v344
        %371 = vmatpush.msra.mxu0 %v343
        %372 = vmatpush.msra.mxu0 %v342
        %373 = vmatpush.msra.mxu0 %v341
        %374 = vmatpush.msra.mxu0 %v340
        %375 = vmatpush.msra.mxu0 %v339
        %376 = vmatpush.msra.mxu0 %v338
        %377 = vmatpush.msra.mxu0 %v337
        %378 = vmatpush.msra.mxu0 %v336
        %379 = vmatpush.msra.mxu0 %v335
        %380 = vmatpush.msra.mxu0 %v334
        %381 = vmatpush.msra.mxu0 %v333
        %382 = vmatpush.msra.mxu0 %v332
        %383 = vmatpush.msra.mxu0 %v331
        %384 = vmatpush.msra.mxu0 %v330
        %385 = vmatmul.f32.gmra.mxu0 %v311
        %v386 = vpop.f32.mrf.mxu0
        %v387 = vadd.f32 %v364, %v386
        %388 = vmatmul.f32.gmra.mxu0 %v313
        %v389 = vpop.f32.mrf.mxu0
        %v390 = vadd.f32 %v367, %v389
        %391 = vdwg.mxu0
        %v392 = vld [vmem:[%s7] sm:$0xff]
        %v393 = vld [vmem:[%s7 + $0x8] sm:$0xff]
        %v394 = vld [vmem:[%s4] sm:$0xff]
        %396 = vset.pattern.permute.xlu0 0
        %397 = vperm.xlu0 %396, %v392
        %v398 = vpop.permute.xlu0 %397
        %vm400 = vcmask 130048
        %v402 = vsel %vm400, %v394, 0
        %404 = vmatpush.msra.mxu0 0.0
        %405 = vmatpush.msra.mxu0 0.0
        %406 = vmatpush.msra.mxu0 0.0
        %407 = vmatpush.msra.mxu0 0.0
        %408 = vmatpush.msra.mxu0 0.0
        %409 = vmatpush.msra.mxu0 0.0
        %410 = vmatpush.msra.mxu0 0.0
        %411 = vmatpush.msra.mxu0 0.0
        %412 = vmatpush.msra.mxu0 0.0
        %413 = vmatpush.msra.mxu0 0.0
        %414 = vmatpush.msra.mxu0 0.0
        %415 = vmatpush.msra.mxu0 0.0
        %416 = vmatpush.msra.mxu0 0.0
        %417 = vmatpush.msra.mxu0 0.0
        %418 = vmatpush.msra.mxu0 %v390
        %419 = vmatpush.msra.mxu0 %v387
        %420 = vmatmul.f32.gmra.mxu0 %v402
        %v421 = vpop.f32.mrf.mxu0
        %v422 = vadd.f32 %v398, %v421
        %423 = vdwg.mxu0
        %v424 = vadd.f32 %v422, 3.0
        %v425 = vmax.f32 %v424, 0.0
        %v426 = vmin.f32 %v425, 6.0
        %v427 = vmul.f32 %v422, %v426
        %v428 = vmul.f32 %v427, 0.16666667
        %v429 = vld [vmem:[%s5] sm:$0xff]
        %v430 = vld [vmem:[%s5 + $0x8] sm:$0xff]
        %431 = vset.pattern.permute.xlu0 1
        %432 = vperm.xlu0 %431, %v392
        %v433 = vpop.permute.xlu0 %432
        %436 = vset.pattern.permute.xlu0 1
        %437 = vperm.xlu0 %436, %v393
        %v438 = vpop.permute.xlu0 %437
        %vm440 = vcmask 64512
        %v442 = vsel %vm440, %v429, 0
        %v445 = vsel %vm440, %v430, 0
        %447 = vmatpush.msra.mxu0 0.0
        %448 = vmatpush.msra.mxu0 0.0
        %449 = vmatpush.msra.mxu0 0.0
        %450 = vmatpush.msra.mxu0 0.0
        %451 = vmatpush.msra.mxu0 0.0
        %452 = vmatpush.msra.mxu0 0.0
        %453 = vmatpush.msra.mxu0 0.0
        %454 = vmatpush.msra.mxu0 0.0
        %455 = vmatpush.msra.mxu0 0.0
        %456 = vmatpush.msra.mxu0 0.0
        %457 = vmatpush.msra.mxu0 0.0
        %458 = vmatpush.msra.mxu0 0.0
        %459 = vmatpush.msra.mxu0 0.0
        %460 = vmatpush.msra.mxu0 0.0
        %461 = vmatpush.msra.mxu0 0.0
        %462 = vmatpush.msra.mxu0 %v428
        %463 = vmatmul.f32.gmra.mxu0 %v442
        %v464 = vpop.f32.mrf.mxu0
        %v465 = vadd.f32 %v433, %v464
        %466 = vmatmul.f32.gmra.mxu0 %v445
        %v467 = vpop.f32.mrf.mxu0
        %v468 = vadd.f32 %v438, %v467
        %469 = vdwg.mxu0
        %v470 = vxor.u32 %v465, 2147483648
        %v471 = vxor.u32 %v468, 2147483648
        %v472 = vmul.f32 %v470, 1.442695
        %v473 = vpow.pop %v472
        %v474 = vmul.f32 %v471, 1.442695
        %v475 = vpow.pop %v474
        %v476 = vadd.f32 %v473, 1.0
        %v477 = vadd.f32 %v475, 1.0
        %v478 = vrcp.pop %v476
        %v479 = vmul.f32 %v476, %v478
        %v480 = vsub.f32 1.0, %v479
        %v481 = vmul.f32 %v478, %v480
        %v482 = vadd.f32 %v478, %v481
        %vm483 = vweird.f32 %v476
        %vm484 = vweird.f32 %v478
        %vm485 = vmor %vm483, %vm484
        %v486 = vsel %vm485, %v478, %v482
        %v487 = vand.u32 2147483647, %v476
        %vm488 = vcmp.eq.f32.partialorder %v487, 8.507059e+37
        %v489 = vand.u32 %v476, 2147483648
        %v490 = vor.u32 1.1754944e-38, %v489
        %v491 = vsel %vm488, %v490, %v486
        %v492 = vmul.f32 1.0, %v491
        %v493 = vrcp.pop %v477
        %v494 = vmul.f32 %v477, %v493
        %v495 = vsub.f32 1.0, %v494
        %v496 = vmul.f32 %v493, %v495
        %v497 = vadd.f32 %v493, %v496
        %vm498 = vweird.f32 %v477
        %vm499 = vweird.f32 %v493
        %vm500 = vmor %vm498, %vm499
        %v501 = vsel %vm500, %v493, %v497
        %v502 = vand.u32 2147483647, %v477
        %vm503 = vcmp.eq.f32.partialorder %v502, 8.507059e+37
        %v504 = vand.u32 %v477, 2147483648
        %v505 = vor.u32 1.1754944e-38, %v504
        %v506 = vsel %vm503, %v505, %v501
        %v507 = vmul.f32 1.0, %v506
        %v508 = vld [vmem:[%s6] sm:$0xff]
        %v509 = vld [vmem:[%s6 + $0x8] sm:$0xff]
        %510 = vset.pattern.permute.xlu0 2
        %511 = vperm.xlu0 %510, %v392
        %v512 = vpop.permute.xlu0 %511
        %514 = vset.pattern.permute.xlu0 2
        %515 = vperm.xlu0 %514, %v393
        %v516 = vpop.permute.xlu0 %515
        %519 = vrot.lane.b32.xlu0 %v428, 112
        %v520 = vpop.permute.xlu0 %519
        %v523 = vsel %vm440, %v508, 0
        %v526 = vsel %vm440, %v509, 0
        %528 = vmatpush.msra.mxu0 0.0
        %529 = vmatpush.msra.mxu0 0.0
        %530 = vmatpush.msra.mxu0 0.0
        %531 = vmatpush.msra.mxu0 0.0
        %532 = vmatpush.msra.mxu0 0.0
        %533 = vmatpush.msra.mxu0 0.0
        %534 = vmatpush.msra.mxu0 0.0
        %535 = vmatpush.msra.mxu0 0.0
        %536 = vmatpush.msra.mxu0 0.0
        %537 = vmatpush.msra.mxu0 0.0
        %538 = vmatpush.msra.mxu0 0.0
        %539 = vmatpush.msra.mxu0 0.0
        %540 = vmatpush.msra.mxu0 0.0
        %541 = vmatpush.msra.mxu0 0.0
        %542 = vmatpush.msra.mxu0 0.0
        %543 = vmatpush.msra.mxu0 %v520
        %544 = vmatmul.f32.gmra.mxu0 %v523
        %v545 = vpop.f32.mrf.mxu0
        %v546 = vadd.f32 %v512, %v545
        %547 = vmatmul.f32.gmra.mxu0 %v526
        %v548 = vpop.f32.mrf.mxu0
        %v549 = vadd.f32 %v516, %v548
        %550 = vdwg.mxu0
        %v551 = vxor.u32 %v546, 2147483648
        %v552 = vxor.u32 %v549, 2147483648
        %v553 = vmul.f32 %v551, 1.442695
        %v554 = vpow.pop %v553
        %v555 = vmul.f32 %v552, 1.442695
        %v556 = vpow.pop %v555
        %v557 = vadd.f32 %v554, 1.0
        %v558 = vadd.f32 %v556, 1.0
        %v559 = vrcp.pop %v557
        %v560 = vmul.f32 %v557, %v559
        %v561 = vsub.f32 1.0, %v560
        %v562 = vmul.f32 %v559, %v561
        %v563 = vadd.f32 %v559, %v562
        %vm564 = vweird.f32 %v557
        %vm565 = vweird.f32 %v559
        %vm566 = vmor %vm564, %vm565
        %v567 = vsel %vm566, %v559, %v563
        %v568 = vand.u32 2147483647, %v557
        %vm569 = vcmp.eq.f32.partialorder %v568, 8.507059e+37
        %v570 = vand.u32 %v557, 2147483648
        %v571 = vor.u32 1.1754944e-38, %v570
        %v572 = vsel %vm569, %v571, %v567
        %v573 = vmul.f32 1.0, %v572
        %v574 = vrcp.pop %v558
        %v575 = vmul.f32 %v558, %v574
        %v576 = vsub.f32 1.0, %v575
        %v577 = vmul.f32 %v574, %v576
        %v578 = vadd.f32 %v574, %v577
        %vm579 = vweird.f32 %v558
        %vm580 = vweird.f32 %v574
        %vm581 = vmor %vm579, %vm580
        %v582 = vsel %vm581, %v574, %v578
        %v583 = vand.u32 2147483647, %v558
        %vm584 = vcmp.eq.f32.partialorder %v583, 8.507059e+37
        %v585 = vand.u32 %v558, 2147483648
        %v586 = vor.u32 1.1754944e-38, %v585
        %v587 = vsel %vm584, %v586, %v582
        %v588 = vmul.f32 1.0, %v587
        %v589 = vld [vmem:[%s2] sm:$0xff]
        %v590 = vld [vmem:[%s2 + $0x8] sm:$0xff]
        %v591 = vld [vmem:[%s2 + $0x10] sm:$0xff]
        %v592 = vld [vmem:[%s2 + $0x18] sm:$0xff]
        %v594 = vsel %vm400, %v492, 0
        %v597 = vsel %vm400, %v507, 0
        %599 = vmatpush.msra.mxu0 0.0
        %600 = vmatpush.msra.mxu0 0.0
        %601 = vmatpush.msra.mxu0 0.0
        %602 = vmatpush.msra.mxu0 0.0
        %603 = vmatpush.msra.mxu0 0.0
        %604 = vmatpush.msra.mxu0 0.0
        %605 = vmatpush.msra.mxu0 0.0
        %606 = vmatpush.msra.mxu0 0.0
        %607 = vmatpush.msra.mxu0 0.0
        %608 = vmatpush.msra.mxu0 0.0
        %609 = vmatpush.msra.mxu0 0.0
        %610 = vmatpush.msra.mxu0 0.0
        %611 = vmatpush.msra.mxu0 0.0
        %612 = vmatpush.msra.mxu0 0.0
        %613 = vmatpush.msra.mxu0 %v591
        %614 = vmatpush.msra.mxu0 %v589
        %615 = vmatmul.f32.gmra.mxu0 %v594
        %v616 = vpop.f32.mrf.mxu0
        %v617 = vadd.f32 0.0, %v616
        %618 = vmatmul.f32.gmra.mxu0 %v597
        %v619 = vpop.f32.mrf.mxu0
        %v620 = vadd.f32 0.0, %v619
        %621 = vdwg.mxu0
        %622 = vmatpush.msra.mxu0 0.0
        %623 = vmatpush.msra.mxu0 0.0
        %624 = vmatpush.msra.mxu0 0.0
        %625 = vmatpush.msra.mxu0 0.0
        %626 = vmatpush.msra.mxu0 0.0
        %627 = vmatpush.msra.mxu0 0.0
        %628 = vmatpush.msra.mxu0 0.0
        %629 = vmatpush.msra.mxu0 0.0
        %630 = vmatpush.msra.mxu0 0.0
        %631 = vmatpush.msra.mxu0 0.0
        %632 = vmatpush.msra.mxu0 0.0
        %633 = vmatpush.msra.mxu0 0.0
        %634 = vmatpush.msra.mxu0 0.0
        %635 = vmatpush.msra.mxu0 0.0
        %636 = vmatpush.msra.mxu0 %v592
        %637 = vmatpush.msra.mxu0 %v590
        %638 = vmatmul.f32.gmra.mxu0 %v594
        %v639 = vpop.f32.mrf.mxu0
        %v640 = vadd.f32 0.0, %v639
        %641 = vmatmul.f32.gmra.mxu0 %v597
        %v642 = vpop.f32.mrf.mxu0
        %v643 = vadd.f32 0.0, %v642
        %644 = vdwg.mxu0
        %v645 = vld [vmem:[%s3] sm:$0xff]
        %v646 = vld [vmem:[%s3 + $0x8] sm:$0xff]
        %v647 = vld [vmem:[%s3 + $0x10] sm:$0xff]
        %v648 = vld [vmem:[%s3 + $0x18] sm:$0xff]
        %v650 = vsel %vm400, %v573, 0
        %v653 = vsel %vm400, %v588, 0
        %655 = vmatpush.msra.mxu0 0.0
        %656 = vmatpush.msra.mxu0 0.0
        %657 = vmatpush.msra.mxu0 0.0
        %658 = vmatpush.msra.mxu0 0.0
        %659 = vmatpush.msra.mxu0 0.0
        %660 = vmatpush.msra.mxu0 0.0
        %661 = vmatpush.msra.mxu0 0.0
        %662 = vmatpush.msra.mxu0 0.0
        %663 = vmatpush.msra.mxu0 0.0
        %664 = vmatpush.msra.mxu0 0.0
        %665 = vmatpush.msra.mxu0 0.0
        %666 = vmatpush.msra.mxu0 0.0
        %667 = vmatpush.msra.mxu0 0.0
        %668 = vmatpush.msra.mxu0 0.0
        %669 = vmatpush.msra.mxu0 %v647
        %670 = vmatpush.msra.mxu0 %v645
        %671 = vmatmul.f32.gmra.mxu0 %v650
        %v672 = vpop.f32.mrf.mxu0
        %v673 = vadd.f32 0.0, %v672
        %674 = vmatmul.f32.gmra.mxu0 %v653
        %v675 = vpop.f32.mrf.mxu0
        %v676 = vadd.f32 0.0, %v675
        %677 = vdwg.mxu0
        %678 = vmatpush.msra.mxu0 0.0
        %679 = vmatpush.msra.mxu0 0.0
        %680 = vmatpush.msra.mxu0 0.0
        %681 = vmatpush.msra.mxu0 0.0
        %682 = vmatpush.msra.mxu0 0.0
        %683 = vmatpush.msra.mxu0 0.0
        %684 = vmatpush.msra.mxu0 0.0
        %685 = vmatpush.msra.mxu0 0.0
        %686 = vmatpush.msra.mxu0 0.0
        %687 = vmatpush.msra.mxu0 0.0
        %688 = vmatpush.msra.mxu0 0.0
        %689 = vmatpush.msra.mxu0 0.0
        %690 = vmatpush.msra.mxu0 0.0
        %691 = vmatpush.msra.mxu0 0.0
        %692 = vmatpush.msra.mxu0 %v648
        %693 = vmatpush.msra.mxu0 %v646
        %694 = vmatmul.f32.gmra.mxu0 %v650
        %v695 = vpop.f32.mrf.mxu0
        %v696 = vadd.f32 0.0, %v695
        %697 = vmatmul.f32.gmra.mxu0 %v653
        %v698 = vpop.f32.mrf.mxu0
        %v699 = vadd.f32 0.0, %v698
        %700 = vdwg.mxu0
        %v701 = vmul.f32 %v310, %v673
        %v702 = vmul.f32 %v311, %v696
        %v703 = vmul.f32 %v312, %v676
        %v704 = vmul.f32 %v313, %v699
        %v705 = vmul.f32 %v701, %v617
        %v706 = vmul.f32 %v702, %v640
        %v707 = vmul.f32 %v703, %v620
        %v708 = vmul.f32 %v704, %v643
        %709 = vst [vmem:[%s301] sm:$0xff] %v705
        %710 = vst [vmem:[%s301 + $0x8] sm:$0xff] %v706
        %711 = vst [vmem:[%s301 + $0x10] sm:$0xff] %v707
        %712 = vst [vmem:[%s301 + $0x18] sm:$0xff] %v708
        %s713 = sand.u32 %s203, 1
        %s714 = scalar_lea.sflag [#allocation3], %s713
        %s715 = sand.u32 %s203, 1
        %s716 = smul.addr %s715, 32
        %s717 = scalar_lea.vmem [#allocation2], %s716
        // Predicated region
        $region53: #{tpu_custom_call.1} parent=51 // pred_check
          %p718 = pneg %p213
        $region54: #{tpu_custom_call.1} parent=51 // pred_check_branch
          %720 = sbr.rel (%p718) target = $region56
        $region55: #{tpu_custom_call.1} parent=51 // pred_region
          %s721 = smul.u32 2, %s22
          %723 = vsyncadd %s714, 0
          %s724 = smul.addr %s721, 2
          %s725 = smul.addr %s724, 8
          %s726 = scalar_lea.hbm %s8, %s725
          %s727 = sshll.u32 %s717, 4
          %s728 = int_to_ptr.vmem [resolvable:$true] %s727
          %s729 = sshll.u32 %s726, 4
          %s730 = int_to_ptr.hbm [resolvable:$true] %s729
          %735 = dma.vmem_to_hbm [thread:$0]  %s728, 512, %s730, %s714, 256, 256, 16
        $region56: #{tpu_custom_call.1} parent=51 // pred_fallthru
          _
      $region52: #{tpu_custom_call.1} parent=5 // pred_fallthru
        _
      %p736 = scmp.le.s32.totalorder 2, %s17
      // Predicated region
      $region57: #{tpu_custom_call.1} parent=5 // pred_check
        %p737 = pneg %p736
      $region58: #{tpu_custom_call.1} parent=5 // pred_check_branch
        %739 = sbr.rel (%p737) target = $region60
      $region59: #{tpu_custom_call.1} parent=5 // pred_region
        %s740 = ssub.s32 %s17, 2
        // Predicated region
        $region61: #{tpu_custom_call.1} parent=59 // pred_check
          %p741 = pneg %p219
        $region62: #{tpu_custom_call.1} parent=59 // pred_check_branch
          %743 = sbr.rel (%p741) target = $region64
        $region63: #{tpu_custom_call.1} parent=59 // pred_region
          %s744 = sand.u32 %s204, 1
          %s745 = scalar_lea.sflag [#allocation3], %s744
          %s746 = sand.u32 %s204, 1
          %s747 = smul.addr %s746, 32
          %s748 = scalar_lea.vmem [#allocation2], %s747
          %750 = dma.done %s745, 512
        $region64: #{tpu_custom_call.1} parent=59 // pred_fallthru
          _
      $region60: #{tpu_custom_call.1} parent=5 // pred_fallthru
        _
    $region6: #{tpu_custom_call.1} parent=1 // loop_footer
      %s21 = sadd.s32 1, %s17
    $region7: #{tpu_custom_call.1} parent=1 // loop_footer_branch
      %16 = sbr.rel target = $region3
    $region8: #{tpu_custom_call.1} parent=1 // loop_exit
      _
    %751 = vsyncpa [#allocation3], 1
    %s752 = scalar_lea.sflag [#allocation3], 1
    %753 = vsyncpa %s752, 1

</llo_original>
